<compile_context>
chip_gen: v5e
topology: v5e:2x2
jax: 0.10.0
libtpu: 0.0.40
codegen_flags: <defaults>
</compile_context>

<pallas_src>
import jax
import jax.numpy as jnp
from jax.experimental import pallas as pl
from jax.experimental.pallas import tpu as pltpu

_LANES = 128
_SUBLANES = 8
_CORE_SPLITS = 2     # leading "parallel" axis -> both TensorCores on v7x
_ROW_ALIGN = 32      # block_rows multiple of 32: valid tiling for f32/bf16/int8


def _round_up(x, m):
    return ((x + m - 1) // m) * m


def _term_f32(x, lab):
    """Per-element weighted-BCE term in f32; loss == -sum(term) / B.

    Shares one exp / one log / one divide between sigmoid(x), 1 - sigmoid(x),
    log(sigmoid(x)) and log(1 - sigmoid(x)).  Exactly 0 for the padding
    sentinel (x = -1e4, lab = 0), with no inf/NaN along the way.
    """
    e = jnp.exp(-jnp.abs(x))                 # exp(-|x|) in (0, 1]
    d = 1.0 / (1.0 + e)                      # sigmoid(|x|)
    ed = e * d                               # sigmoid(-|x|)
    nonneg = x >= 0.0
    outs = jnp.where(nonneg, d, ed)          # sigmoid(x)
    neg_outs = jnp.where(nonneg, ed, d)      # 1 - sigmoid(x)
    log1pe = jnp.log(1.0 + e)
    log_p = jnp.minimum(x, 0.0) - log1pe     # log(sigmoid(x)), stable
    log_n = jnp.minimum(-x, 0.0) - log1pe    # log(1 - sigmoid(x)), stable
    return lab * neg_outs * log_p + 2.0 * (1.0 - lab) * outs * log_n


def _fp_similarity_loss_kernel(x_ref, lab_ref, out_ref):
    """x_ref/lab_ref: (block_rows, 128) tiles (source dtype).
    out_ref: (8, 128) f32 partial-sum block, revisited across grid axis 1."""
    @pl.when(pl.program_id(1) == 0)
    def _init():
        out_ref[...] = jnp.zeros_like(out_ref)

    x = x_ref[...].astype(jnp.float32)
    lab = lab_ref[...].astype(jnp.float32)
    term = _term_f32(x, lab)
    # Tile-aligned vreg-granular partial reduce: (block_rows,128) -> (8,128).
    out_ref[...] += jnp.sum(term.reshape(-1, _SUBLANES, _LANES), axis=0)


def _loss_xla(x, lab):
    """Fused XLA fallback for tiny batches (same math as the kernel)."""
    x = x.astype(jnp.float32)
    lab = lab.astype(jnp.float32)
    return -jnp.sum(_term_f32(x, lab)) / jnp.float32(x.shape[0])


def fp_similarity_loss(output, labels, *, block_rows=None, min_pallas_batch=8192):
    """output: [B, C] float logits; labels: [B, 1] (or [B]) in {0, 1}.
    Returns the scalar f32 loss of FPSimilarityLoss.forward."""
    B = output.shape[0]
    assert labels.shape[0] == B

    # Only column 0 is ever used -> slice before the kernel ([B] stream, not [B, C]).
    x = output[:, 0]
    lab = labels.reshape(-1)
    if not jnp.issubdtype(lab.dtype, jnp.floating):
        lab = lab.astype(jnp.float32)

    if B < min_pallas_batch:
        # Launch + grid-step overhead would dominate; XLA fuses the same math.
        return _loss_xla(x, lab)

    rows_needed = pl.cdiv(B, _LANES)
    if block_rows is None:
        block_rows = min(4096, _round_up(rows_needed, _ROW_ALIGN))
    block_rows = max(_ROW_ALIGN, _round_up(block_rows, _ROW_ALIGN))

    # Pad to a whole number of (_CORE_SPLITS * block_rows, 128) super-tiles.
    rows = _round_up(rows_needed, _CORE_SPLITS * block_rows)
    pad = rows * _LANES - B
    if pad:
        # Sentinel padding: term(x=-1e4, lab=0) == 0 exactly -> no in-kernel mask.
        x = jnp.pad(x, (0, pad), constant_values=-1e4)
        lab = jnp.pad(lab, (0, pad), constant_values=0)
    x2 = x.reshape(rows, _LANES)
    lab2 = lab.reshape(rows, _LANES)

    inner_steps = rows // (_CORE_SPLITS * block_rows)

    def in_map(c, i):
        return (c * inner_steps + i, 0)

    # TODO(synk): if a profile shows exposed DMA at step boundaries, add
    # pipeline_mode=pl.Buffered(3) on the two input BlockSpecs.
    partials = pl.pallas_call(
        _fp_similarity_loss_kernel,
        out_shape=jax.ShapeDtypeStruct((_CORE_SPLITS * _SUBLANES, _LANES), jnp.float32),
        grid_spec=pltpu.PrefetchScalarGridSpec(
            num_scalar_prefetch=0,
            grid=(_CORE_SPLITS, inner_steps),
            in_specs=[
                pl.BlockSpec((block_rows, _LANES), in_map),
                pl.BlockSpec((block_rows, _LANES), in_map),
            ],
            out_specs=pl.BlockSpec((_SUBLANES, _LANES), lambda c, i: (c, 0)),
        ),
        compiler_params=pltpu.CompilerParams(
            # Core-parallel split of the reduction (v7x megacore) x carried
            # accumulator along the inner reduction axis.
            dimension_semantics=("parallel", "arbitrary"),
        ),
    )(x2, lab2)

    return -jnp.sum(partials) / jnp.float32(B)


def _reference(output, labels):
    """Direct transcription of the PyTorch forward (for testing)."""
    x = output[:, 0:1].astype(jnp.float32)
    labels = labels.astype(jnp.float32)
    outs = jax.nn.sigmoid(x)
    neg_outs = 1.0 - outs
    pos_loss = labels * jnp.log(outs)
    neg_loss = (1.0 - labels) * jnp.log(neg_outs)
    h_pos = neg_outs * pos_loss
    h_neg = outs * neg_loss
    return -jnp.mean(h_pos) - 2.0 * jnp.mean(h_neg)


if __name__ == "__main__":
    key = jax.random.PRNGKey(0)
    k1, k2, k3, k4 = jax.random.split(key, 4)

    # Pallas path: non-multiple-of-128 batch, small block_rows + forced low
    # min_pallas_batch so the grid is (2, 2) -> exercises the core-split axis,
    # cross-step output accumulation and sentinel tail padding.
    B1, C1 = 8325, 4
    out1 = jax.random.normal(k1, (B1, C1), dtype=jnp.float32)
    lab1 = jax.random.bernoulli(k2, p=0.5, shape=(B1, 1)).astype(jnp.float32)
    loss1 = fp_similarity_loss(out1, lab1, block_rows=32, min_pallas_batch=1)
    jax.block_until_ready(loss1)
    ref1 = _reference(out1, lab1)
    assert jnp.allclose(loss1, ref1, atol=1e-5, rtol=1e-4), (loss1, ref1)

    # Tiny-input default path: fused-XLA fallback (no kernel launch).
    B2, C2 = 64, 4
    out2 = jax.random.normal(k3, (B2, C2), dtype=jnp.float32)
    lab2 = jax.random.bernoulli(k4, p=0.5, shape=(B2, 1)).astype(jnp.float32)
    loss2 = fp_similarity_loss(out2, lab2)
    jax.block_until_ready(loss2)
    ref2 = _reference(out2, lab2)
    assert jnp.allclose(loss2, ref2, atol=1e-5, rtol=1e-4), (loss2, ref2)

    print("KERNEL_OK")
</pallas_src>

<mosaic_0001>
module attributes {stable_mosaic.version = 11 : i64} {
  func.func @_fp_similarity_loss_kernel(%arg0: i32, %arg1: i32, %arg2: memref<32x128xf32, #tpu.memory_space<vmem>>, %arg3: memref<32x128xf32, #tpu.memory_space<vmem>>, %arg4: memref<8x128xf32, #tpu.memory_space<vmem>>) attributes {dimension_semantics = [#tpu.dimension_semantics<parallel>, #tpu.dimension_semantics<arbitrary>], iteration_bounds = array<i64: 2, 2>, scalar_prefetch = 0 : i64, scratch_operands = 0 : i64, tpu.core_type = #tpu.core_type<tc>, window_params = [{transform_indices = @transform_0, window_bounds = array<i64: 32, 128>}, {transform_indices = @transform_1, window_bounds = array<i64: 32, 128>}, {transform_indices = @transform_2, window_bounds = array<i64: 8, 128>}]} {
    %c0_i32 = arith.constant 0 : i32
    %0 = arith.cmpi eq, %arg1, %c0_i32 : i32
    %1 = arith.extui %0 : i1 to i32
    %c0_i32_0 = arith.constant 0 : i32
    %2 = arith.cmpi ne, %1, %c0_i32_0 : i32
    scf.if %2 {
      %cst_18 = arith.constant 0.000000e+00 : f32
      %43 = vector.broadcast %cst_18 : f32 to vector<8x128xf32>
      %c0_19 = arith.constant 0 : index
      %c0_20 = arith.constant 0 : index
      %44 = vector.load %arg4[%c0_19, %c0_20] : memref<8x128xf32, #tpu.memory_space<vmem>>, vector<8x128xf32>
      tpu.vector_store %arg4[%c0_19, %c0_20], %43 {strides = array<i32>} : memref<8x128xf32, #tpu.memory_space<vmem>>, vector<8x128xf32>,
    } else {
    }
    %c0 = arith.constant 0 : index
    %c0_1 = arith.constant 0 : index
    %3 = vector.load %arg2[%c0, %c0_1] : memref<32x128xf32, #tpu.memory_space<vmem>>, vector<32x128xf32>
    %c0_2 = arith.constant 0 : index
    %c0_3 = arith.constant 0 : index
    %4 = vector.load %arg3[%c0_2, %c0_3] : memref<32x128xf32, #tpu.memory_space<vmem>>, vector<32x128xf32>
    %5 = math.absf %3 : vector<32x128xf32>
    %cst = arith.constant 0.000000e+00 : f32
    %6 = vector.broadcast %cst : f32 to vector<32x128xf32>
    %7 = arith.subf %6, %5 : vector<32x128xf32>
    %8 = math.exp %7 : vector<32x128xf32>
    %cst_4 = arith.constant 1.000000e+00 : f32
    %9 = vector.broadcast %cst_4 : f32 to vector<32x128xf32>
    %10 = arith.addf %9, %8 : vector<32x128xf32>
    %cst_5 = arith.constant 1.000000e+00 : f32
    %11 = vector.broadcast %cst_5 : f32 to vector<32x128xf32>
    %12 = arith.divf %11, %10 : vector<32x128xf32>
    %13 = arith.mulf %8, %12 : vector<32x128xf32>
    %cst_6 = arith.constant 0.000000e+00 : f32
    %14 = vector.broadcast %cst_6 : f32 to vector<32x128xf32>
    %15 = arith.cmpf oge, %3, %14 : vector<32x128xf32>
    %16 = arith.select %15, %12, %13 : vector<32x128xi1>, vector<32x128xf32>
    %17 = arith.select %15, %13, %12 : vector<32x128xi1>, vector<32x128xf32>
    %cst_7 = arith.constant 1.000000e+00 : f32
    %18 = vector.broadcast %cst_7 : f32 to vector<32x128xf32>
    %19 = arith.addf %18, %8 : vector<32x128xf32>
    %20 = math.log %19 : vector<32x128xf32>
    %cst_8 = arith.constant 0.000000e+00 : f32
    %21 = vector.broadcast %cst_8 : f32 to vector<32x128xf32>
    %22 = arith.minimumf %3, %21 : vector<32x128xf32>
    %23 = arith.subf %22, %20 : vector<32x128xf32>
    %cst_9 = arith.constant 0.000000e+00 : f32
    %24 = vector.broadcast %cst_9 : f32 to vector<32x128xf32>
    %25 = arith.subf %24, %3 : vector<32x128xf32>
    %cst_10 = arith.constant 0.000000e+00 : f32
    %26 = vector.broadcast %cst_10 : f32 to vector<32x128xf32>
    %27 = arith.minimumf %25, %26 : vector<32x128xf32>
    %28 = arith.subf %27, %20 : vector<32x128xf32>
    %29 = arith.mulf %4, %17 : vector<32x128xf32>
    %30 = arith.mulf %29, %23 : vector<32x128xf32>
    %cst_11 = arith.constant 1.000000e+00 : f32
    %31 = vector.broadcast %cst_11 : f32 to vector<32x128xf32>
    %32 = arith.subf %31, %4 : vector<32x128xf32>
    %cst_12 = arith.constant 2.000000e+00 : f32
    %33 = vector.broadcast %cst_12 : f32 to vector<32x128xf32>
    %34 = arith.mulf %33, %32 : vector<32x128xf32>
    %35 = arith.mulf %34, %16 : vector<32x128xf32>
    %36 = arith.mulf %35, %28 : vector<32x128xf32>
    %37 = arith.addf %30, %36 : vector<32x128xf32>
    %c0_13 = arith.constant 0 : index
    %c0_14 = arith.constant 0 : index
    %38 = vector.load %arg4[%c0_13, %c0_14] : memref<8x128xf32, #tpu.memory_space<vmem>>, vector<8x128xf32>
    %39 = vector.shape_cast %37 : vector<32x128xf32> to vector<4x8x128xf32>
    %cst_15 = arith.constant dense<0.000000e+00> : vector<8x128xf32>
    %40 = vector.multi_reduction <add>, %39, %cst_15 [0] : vector<4x8x128xf32> to vector<8x128xf32>
    %41 = arith.addf %38, %40 : vector<8x128xf32>
    %c0_16 = arith.constant 0 : index
    %c0_17 = arith.constant 0 : index
    %42 = vector.load %arg4[%c0_16, %c0_17] : memref<8x128xf32, #tpu.memory_space<vmem>>, vector<8x128xf32>
    tpu.vector_store %arg4[%c0_16, %c0_17], %41 {strides = array<i32>} : memref<8x128xf32, #tpu.memory_space<vmem>>, vector<8x128xf32>,
    return
  }
  func.func @transform_0(%arg0: i32, %arg1: i32) -> (i32, i32) {
    %c2_i32 = arith.constant 2 : i32
    %0 = arith.muli %arg0, %c2_i32 : i32
    %1 = arith.addi %0, %arg1 : i32
    %c0_i32 = arith.constant 0 : i32
    %c0_i32_0 = arith.constant 0 : i32
    return %1, %c0_i32 : i32, i32
  }
  func.func @transform_1(%arg0: i32, %arg1: i32) -> (i32, i32) {
    %c2_i32 = arith.constant 2 : i32
    %0 = arith.muli %arg0, %c2_i32 : i32
    %1 = arith.addi %0, %arg1 : i32
    %c0_i32 = arith.constant 0 : i32
    %c0_i32_0 = arith.constant 0 : i32
    return %1, %c0_i32 : i32, i32
  }
  func.func @transform_2(%arg0: i32, %arg1: i32) -> (i32, i32) {
    %c0_i32 = arith.constant 0 : i32
    %c0_i32_0 = arith.constant 0 : i32
    return %arg0, %c0_i32 : i32, i32
  }
}

</mosaic_0001>

<llo_original>
// kernel: tpu_custom_call.1
$region0: #{tpu_custom_call.1}
  #allocation0 [shape = 'u32[]', space=smem, size = 0x4, offset = 0x4, fixed_abs, tag = 'smem constant byte address 0x4 - core index']
  #allocation1 [shape = 'u32[72,128]{1,0:T(1,128)}', space=vmem, size = 0x9000, scoped, tag = 'internal scratch']
  %s0 = inlined_call_operand.hbm [shape: f32[128,128], index: 0, kind: input, shape index: {}]
  %s1 = inlined_call_operand.hbm [shape: f32[128,128], index: 1, kind: input, shape index: {}]
  %s2 = inlined_call_operand.hbm [shape: f32[16,128], index: 2, kind: output, shape index: {}]
  %s3 = sld [smem:[#allocation0]]
  $region53: #{tpu_custom_call.1} parent=0
    _
  %s5 = ssub.s32 1, %s3
  %s6 = scalar_select 0, %s5, %s3
  $region1: #{tpu_custom_call.1} parent=0
    #allocation2 [shape = 'u8[32768]{0}', space=vmem, size = 0x8000, scoped, tag = 'input window, operand 0']
    #allocation3 [shape = 's32[2]{0}', space=sflag, size = 0x8, scoped, tag = 'scoped memory for tpu_custom_call.1']
    #allocation4 [shape = 's32[2]{0}', space=sflag, size = 0x8, scoped, tag = 'scoped memory for tpu_custom_call.1']
    #allocation5 [shape = 'u8[32768]{0}', space=vmem, size = 0x8000, scoped, tag = 'input window, operand 1']
    #allocation6 [shape = 's32[2]{0}', space=sflag, size = 0x8, scoped, tag = 'scoped memory for tpu_custom_call.1']
    #allocation7 [shape = 'u8[8192]{0}', space=vmem, size = 0x2000, scoped, tag = 'output window, operand 0']
    %7 = vsyncpa [#allocation3], 0
    %s8 = scalar_lea.sflag [#allocation3], 1
    %9 = vsyncpa %s8, 0
    %10 = vsyncpa [#allocation6], 0
    %s11 = scalar_lea.sflag [#allocation6], 1
    %12 = vsyncpa %s11, 0
    %13 = vsyncpa [#allocation4], 0
    %s14 = scalar_lea.sflag [#allocation4], 1
    %15 = vsyncpa %s14, 0
    loop: start=0, step=1, limit=6
    $region2: #{tpu_custom_call.1} parent=1 // loop_pre_header
      _
    $region3: #{tpu_custom_call.1} parent=1 // loop_header
      %s17 = sphi 0, %s21
      %p18 = scmp.ge.s32.totalorder %s17, 6
      %s24 = sphi 0, %s36
      %s25 = sphi 0, %s32
      %s26 = sphi 0, %s24
      %s27 = sphi 0, %s25
      %s28 = sphi 0, %s26
      %s29 = sphi 0, %s27
      %s43 = sphi 0, %s45
      %s46 = sphi 0, %s43
      %s47 = sphi 0, %s46
      %s63 = sphi 0, %s47
      %s73 = sphi 0, %s75
      %s76 = sphi 0, %s73
      %s77 = sphi 0, %s76
      %s93 = sphi 0, %s77
      %s99 = sphi 0, %s101
      %s102 = sphi 0, %s99
      %s103 = sphi 0, %s102
      %s119 = sphi 0, %s103
    $region4: #{tpu_custom_call.1} parent=1 // loop_header_branch
      %20 = sbr.rel (%p18) target = $region8
    $region5: #{tpu_custom_call.1} parent=1 // loop_body
      %s22 = ssub.s32 %s17, 1
      %s23 = ssub.s32 %s17, 2
      %s30 = sadd.s32 1, %s25
      %p31 = scmp.ge.s32.totalorder %s30, 2
      %s32 = scalar_select %p31, 0, %s30
      %s33 = sadd.s32 1, %s24
      %s34 = scalar_select %p31, %s33, %s24
      %p35 = scmp.ge.s32.totalorder %s34, 2
      %s36 = scalar_select %p35, 0, %s34
      %s37 = smul.u32 %s24, 2
      %s38 = sadd.s32 %s37, %s25
      %s39 = smul.u32 %s36, 2
      %s40 = sadd.s32 %s39, %s32
      %s41 = ssub.s32 %s38, %s40
      %p42 = scmp.eq.s32.totalorder %s41, 0
      %s44 = sadd.s32 %s43, 1
      %s45 = scalar_select %p42, %s43, %s44
      %p48 = pneg %p42
      %p49 = scmp.eq.s32.totalorder %s17, 3
      %p50 = por %p48, %p49
      %p51 = scmp.ne.s32.totalorder %s43, %s46
      %p52 = scmp.eq.s32.totalorder %s17, 0
      %p53 = por %p51, %p52
      %p54 = scmp.ne.s32.totalorder %s43, %s46
      %p55 = scmp.eq.s32.totalorder %s22, 3
      %p56 = por %p54, %p55
      %p57 = scmp.ne.s32.totalorder %s46, %s47
      %p58 = scmp.eq.s32.totalorder %s22, 0
      %p59 = por %p57, %p58
      %p60 = scmp.ne.s32.totalorder %s46, %s47
      %p61 = scmp.eq.s32.totalorder %s23, 3
      %p62 = por %p60, %p61
      %p64 = scmp.ne.s32.totalorder %s47, %s63
      %p65 = scmp.eq.s32.totalorder %s23, 0
      %p66 = por %p64, %p65
      %s67 = smul.u32 %s24, 2
      %s68 = sadd.s32 %s67, %s25
      %s69 = smul.u32 %s36, 2
      %s70 = sadd.s32 %s69, %s32
      %s71 = ssub.s32 %s68, %s70
      %p72 = scmp.eq.s32.totalorder %s71, 0
      %s74 = sadd.s32 %s73, 1
      %s75 = scalar_select %p72, %s73, %s74
      %p78 = pneg %p72
      %p79 = scmp.eq.s32.totalorder %s17, 3
      %p80 = por %p78, %p79
      %p81 = scmp.ne.s32.totalorder %s73, %s76
      %p82 = scmp.eq.s32.totalorder %s17, 0
      %p83 = por %p81, %p82
      %p84 = scmp.ne.s32.totalorder %s73, %s76
      %p85 = scmp.eq.s32.totalorder %s22, 3
      %p86 = por %p84, %p85
      %p87 = scmp.ne.s32.totalorder %s76, %s77
      %p88 = scmp.eq.s32.totalorder %s22, 0
      %p89 = por %p87, %p88
      %p90 = scmp.ne.s32.totalorder %s76, %s77
      %p91 = scmp.eq.s32.totalorder %s23, 3
      %p92 = por %p90, %p91
      %p94 = scmp.ne.s32.totalorder %s77, %s93
      %p95 = scmp.eq.s32.totalorder %s23, 0
      %p96 = por %p94, %p95
      %s97 = ssub.s32 %s24, %s36
      %p98 = scmp.eq.s32.totalorder %s97, 0
      %s100 = sadd.s32 %s99, 1
      %s101 = scalar_select %p98, %s99, %s100
      %p104 = pneg %p98
      %p105 = scmp.eq.s32.totalorder %s17, 3
      %p106 = por %p104, %p105
      %p107 = scmp.ne.s32.totalorder %s99, %s102
      %p108 = scmp.eq.s32.totalorder %s17, 0
      %p109 = por %p107, %p108
      %p110 = scmp.ne.s32.totalorder %s99, %s102
      %p111 = scmp.eq.s32.totalorder %s22, 3
      %p112 = por %p110, %p111
      %p113 = scmp.ne.s32.totalorder %s102, %s103
      %p114 = scmp.eq.s32.totalorder %s22, 0
      %p115 = por %p113, %p114
      %p116 = scmp.ne.s32.totalorder %s102, %s103
      %p117 = scmp.eq.s32.totalorder %s23, 3
      %p118 = por %p116, %p117
      %p120 = scmp.ne.s32.totalorder %s103, %s119
      %p121 = scmp.eq.s32.totalorder %s23, 0
      %p122 = por %p120, %p121
      %p123 = scmp.le.s32.totalorder 1, %s17
      %p124 = scmp.lt.s32.totalorder %s17, 5
      %p125 = pnand %p123, %p124
      %p126 = pneg %p125
      // Predicated region
      $region9: #{tpu_custom_call.1} parent=5 // pred_check
        _
      $region10: #{tpu_custom_call.1} parent=5 // pred_check_branch
        %128 = sbr.rel (%p125) target = $region12
      $region11: #{tpu_custom_call.1} parent=5 // pred_region
        %s129 = ssub.s32 %s17, 1
      $region12: #{tpu_custom_call.1} parent=5 // pred_fallthru
        _
      %p130 = scmp.lt.s32.totalorder %s17, 4
      // Predicated region
      $region13: #{tpu_custom_call.1} parent=5 // pred_check
        %p131 = pneg %p130
      $region14: #{tpu_custom_call.1} parent=5 // pred_check_branch
        %133 = sbr.rel (%p131) target = $region16
      $region15: #{tpu_custom_call.1} parent=5 // pred_region
        // Predicated region
        $region17: #{tpu_custom_call.1} parent=15 // pred_check
          %p134 = pneg %p53
        $region18: #{tpu_custom_call.1} parent=15 // pred_check_branch
          %136 = sbr.rel (%p134) target = $region20
        $region19: #{tpu_custom_call.1} parent=15 // pred_region
          %s137 = sand.u32 %s43, 1
          %s138 = scalar_lea.sflag [#allocation3], %s137
          %s139 = sand.u32 %s43, 1
          %s140 = smul.addr %s139, 32
          %s141 = scalar_lea.vmem [#allocation2], %s140
          %s142 = smul.u32 %s24, 2
          %s143 = sadd.s32 %s142, %s25
          %s144 = smul.u32 4, %s143
          %146 = vsyncadd %s138, 0
          %s147 = smul.addr %s144, 8
          %s148 = scalar_lea.hbm %s0, %s147
          %s149 = sshll.u32 %s148, 4
          %s150 = int_to_ptr.hbm [resolvable:$true] %s149
          %s151 = sshll.u32 %s141, 4
          %s152 = int_to_ptr.vmem [resolvable:$true] %s151
          %157 = dma.hbm_to_vmem [thread:$0]  %s150, 512, %s152, %s138, 128, 128, 8
        $region20: #{tpu_custom_call.1} parent=15 // pred_fallthru
          _
        // Predicated region
        $region21: #{tpu_custom_call.1} parent=15 // pred_check
          %p158 = pneg %p83
        $region22: #{tpu_custom_call.1} parent=15 // pred_check_branch
          %160 = sbr.rel (%p158) target = $region24
        $region23: #{tpu_custom_call.1} parent=15 // pred_region
          %s161 = sand.u32 %s73, 1
          %s162 = scalar_lea.sflag [#allocation6], %s161
          %s163 = sand.u32 %s73, 1
          %s164 = smul.addr %s163, 32
          %s165 = scalar_lea.vmem [#allocation5], %s164
          %s166 = smul.u32 %s24, 2
          %s167 = sadd.s32 %s166, %s25
          %s168 = smul.u32 4, %s167
          %170 = vsyncadd %s162, 0
          %s171 = smul.addr %s168, 8
          %s172 = scalar_lea.hbm %s1, %s171
          %s173 = sshll.u32 %s172, 4
          %s174 = int_to_ptr.hbm [resolvable:$true] %s173
          %s175 = sshll.u32 %s165, 4
          %s176 = int_to_ptr.vmem [resolvable:$true] %s175
          %181 = dma.hbm_to_vmem [thread:$0]  %s174, 512, %s176, %s162, 128, 128, 8
        $region24: #{tpu_custom_call.1} parent=15 // pred_fallthru
          _
      $region16: #{tpu_custom_call.1} parent=5 // pred_fallthru
        _
      %p182 = scmp.le.s32.totalorder 1, %s17
      %p183 = scmp.lt.s32.totalorder %s17, 5
      %p184 = pnand %p182, %p183
      %p185 = pneg %p184
      // Predicated region
      $region25: #{tpu_custom_call.1} parent=5 // pred_check
        _
      $region26: #{tpu_custom_call.1} parent=5 // pred_check_branch
        %187 = sbr.rel (%p184) target = $region28
      $region27: #{tpu_custom_call.1} parent=5 // pred_region
        %s188 = ssub.s32 %s17, 1
        %s189 = sand.u32 %s46, 1
        %s190 = scalar_lea.sflag [#allocation3], %s189
        %s191 = sand.u32 %s46, 1
        %s192 = smul.addr %s191, 32
        %s193 = scalar_lea.vmem [#allocation2], %s192
        // Predicated region
        $region29: #{tpu_custom_call.1} parent=27 // pred_check
          %p194 = pneg %p59
        $region30: #{tpu_custom_call.1} parent=27 // pred_check_branch
          %196 = sbr.rel (%p194) target = $region32
        $region31: #{tpu_custom_call.1} parent=27 // pred_region
          %198 = dma.done %s190, 512
        $region32: #{tpu_custom_call.1} parent=27 // pred_fallthru
          _
        %s199 = sand.u32 %s76, 1
        %s200 = scalar_lea.sflag [#allocation6], %s199
        %s201 = sand.u32 %s76, 1
        %s202 = smul.addr %s201, 32
        %s203 = scalar_lea.vmem [#allocation5], %s202
        // Predicated region
        $region33: #{tpu_custom_call.1} parent=27 // pred_check
          %p204 = pneg %p89
        $region34: #{tpu_custom_call.1} parent=27 // pred_check_branch
          %206 = sbr.rel (%p204) target = $region36
        $region35: #{tpu_custom_call.1} parent=27 // pred_region
          %208 = dma.done %s200, 512
        $region36: #{tpu_custom_call.1} parent=27 // pred_fallthru
          _
        %s209 = sand.u32 %s46, 1
        %s210 = scalar_lea.sflag [#allocation3], %s209
        %s211 = sand.u32 %s46, 1
        %s212 = smul.addr %s211, 32
        %s213 = scalar_lea.vmem [#allocation2], %s212
        %p214 = pneg %p59
        %p215 = pneg %p56
        %s216 = sand.u32 %s76, 1
        %s217 = scalar_lea.sflag [#allocation6], %s216
        %s218 = sand.u32 %s76, 1
        %s219 = smul.addr %s218, 32
        %s220 = scalar_lea.vmem [#allocation5], %s219
        %p221 = pneg %p89
        %p222 = pneg %p86
        %p223 = pneg %p115
        %p224 = pneg %p112
        %s225 = sand.u32 %s102, 1
        %s226 = scalar_lea.sflag [#allocation4], %s225
        %s227 = sand.u32 %s102, 1
        %s228 = smul.addr %s227, 8
        %s229 = scalar_lea.vmem [#allocation7], %s228
        %s230 = smul.u32 %s26, 2
        %s231 = sadd.s32 %s230, %s27
        %s232 = smul.u32 4, %s231
        %s233 = smul.u32 %s26, 2
        %s234 = sadd.s32 %s233, %s27
        %s235 = smul.u32 4, %s234
        %p236 = scmp.eq.s32.totalorder %s27, 0
        // Predicated region
        $region37: #{tpu_custom_call.1} parent=27 // pred_check
          %p237 = pneg %p236
        $region38: #{tpu_custom_call.1} parent=27 // pred_check_branch
          %239 = sbr.rel (%p237) target = $region40
        $region39: #{tpu_custom_call.1} parent=27 // pred_region
          %240 = vst [vmem:[%s229] sm:$0xff] 0.0
        $region40: #{tpu_custom_call.1} parent=27 // pred_fallthru
          _
        %v241 = vld [vmem:[%s193] sm:$0xff]
        %v242 = vld [vmem:[%s193 + $0x8] sm:$0xff]
        %v243 = vld [vmem:[%s193 + $0x10] sm:$0xff]
        %v244 = vld [vmem:[%s193 + $0x18] sm:$0xff]
        %v245 = vld [vmem:[%s203] sm:$0xff]
        %v246 = vld [vmem:[%s203 + $0x8] sm:$0xff]
        %v247 = vld [vmem:[%s203 + $0x10] sm:$0xff]
        %v248 = vld [vmem:[%s203 + $0x18] sm:$0xff]
        %v249 = vand.u32 2147483647, %v241
        %v250 = vand.u32 2147483647, %v242
        %v251 = vand.u32 2147483647, %v243
        %v252 = vand.u32 2147483647, %v244
        %v253 = vsub.f32 0.0, %v249
        %v254 = vsub.f32 0.0, %v250
        %v255 = vsub.f32 0.0, %v251
        %v256 = vsub.f32 0.0, %v252
        %v257 = vmul.f32 %v253, 1.442695
        %v258 = vpow.pop %v257
        %v259 = vmul.f32 %v254, 1.442695
        %v260 = vpow.pop %v259
        %v261 = vmul.f32 %v255, 1.442695
        %v262 = vpow.pop %v261
        %v263 = vmul.f32 %v256, 1.442695
        %v264 = vpow.pop %v263
        %v265 = vadd.f32 %v258, 1.0
        %v266 = vadd.f32 %v260, 1.0
        %v267 = vadd.f32 %v262, 1.0
        %v268 = vadd.f32 %v264, 1.0
        %v269 = vrcp.pop %v265
        %v270 = vmul.f32 %v265, %v269
        %v271 = vsub.f32 1.0, %v270
        %v272 = vmul.f32 %v269, %v271
        %v273 = vadd.f32 %v269, %v272
        %vm274 = vweird.f32 %v265
        %vm275 = vweird.f32 %v269
        %vm276 = vmor %vm274, %vm275
        %v277 = vsel %vm276, %v269, %v273
        %v278 = vand.u32 2147483647, %v265
        %vm279 = vcmp.eq.f32.partialorder %v278, 8.507059e+37
        %v280 = vand.u32 %v265, 2147483648
        %v281 = vor.u32 1.1754944e-38, %v280
        %v282 = vsel %vm279, %v281, %v277
        %v283 = vmul.f32 1.0, %v282
        %v284 = vrcp.pop %v266
        %v285 = vmul.f32 %v266, %v284
        %v286 = vsub.f32 1.0, %v285
        %v287 = vmul.f32 %v284, %v286
        %v288 = vadd.f32 %v284, %v287
        %vm289 = vweird.f32 %v266
        %vm290 = vweird.f32 %v284
        %vm291 = vmor %vm289, %vm290
        %v292 = vsel %vm291, %v284, %v288
        %v293 = vand.u32 2147483647, %v266
        %vm294 = vcmp.eq.f32.partialorder %v293, 8.507059e+37
        %v295 = vand.u32 %v266, 2147483648
        %v296 = vor.u32 1.1754944e-38, %v295
        %v297 = vsel %vm294, %v296, %v292
        %v298 = vmul.f32 1.0, %v297
        %v299 = vrcp.pop %v267
        %v300 = vmul.f32 %v267, %v299
        %v301 = vsub.f32 1.0, %v300
        %v302 = vmul.f32 %v299, %v301
        %v303 = vadd.f32 %v299, %v302
        %vm304 = vweird.f32 %v267
        %vm305 = vweird.f32 %v299
        %vm306 = vmor %vm304, %vm305
        %v307 = vsel %vm306, %v299, %v303
        %v308 = vand.u32 2147483647, %v267
        %vm309 = vcmp.eq.f32.partialorder %v308, 8.507059e+37
        %v310 = vand.u32 %v267, 2147483648
        %v311 = vor.u32 1.1754944e-38, %v310
        %v312 = vsel %vm309, %v311, %v307
        %v313 = vmul.f32 1.0, %v312
        %v314 = vrcp.pop %v268
        %v315 = vmul.f32 %v268, %v314
        %v316 = vsub.f32 1.0, %v315
        %v317 = vmul.f32 %v314, %v316
        %v318 = vadd.f32 %v314, %v317
        %vm319 = vweird.f32 %v268
        %vm320 = vweird.f32 %v314
        %vm321 = vmor %vm319, %vm320
        %v322 = vsel %vm321, %v314, %v318
        %v323 = vand.u32 2147483647, %v268
        %vm324 = vcmp.eq.f32.partialorder %v323, 8.507059e+37
        %v325 = vand.u32 %v268, 2147483648
        %v326 = vor.u32 1.1754944e-38, %v325
        %v327 = vsel %vm324, %v326, %v322
        %v328 = vmul.f32 1.0, %v327
        %v329 = vmul.f32 %v258, %v283
        %v330 = vmul.f32 %v260, %v298
        %v331 = vmul.f32 %v262, %v313
        %v332 = vmul.f32 %v264, %v328
        %vm333 = vcmp.ge.f32.partialorder %v241, 0.0
        %vm334 = vcmp.ge.f32.partialorder %v242, 0.0
        %vm335 = vcmp.ge.f32.partialorder %v243, 0.0
        %vm336 = vcmp.ge.f32.partialorder %v244, 0.0
        %v337 = vsel %vm333, %v283, %v329
        %v338 = vsel %vm334, %v298, %v330
        %v339 = vsel %vm335, %v313, %v331
        %v340 = vsel %vm336, %v328, %v332
        %v341 = vsel %vm333, %v329, %v283
        %v342 = vsel %vm334, %v330, %v298
        %v343 = vsel %vm335, %v331, %v313
        %v344 = vsel %vm336, %v332, %v328
        %v345 = vlog2.pop %v265
        %v346 = vmul.f32 %v345, 0.6931472
        %v347 = vlog2.pop %v266
        %v348 = vmul.f32 %v347, 0.6931472
        %v349 = vlog2.pop %v267
        %v350 = vmul.f32 %v349, 0.6931472
        %v351 = vlog2.pop %v268
        %v352 = vmul.f32 %v351, 0.6931472
        %v353 = vmin.f32 %v241, 0.0
        %v354 = vmin.f32 %v242, 0.0
        %v355 = vmin.f32 %v243, 0.0
        %v356 = vmin.f32 %v244, 0.0
        %v357 = vsub.f32 %v353, %v346
        %v358 = vsub.f32 %v354, %v348
        %v359 = vsub.f32 %v355, %v350
        %v360 = vsub.f32 %v356, %v352
        %v361 = vsub.f32 0.0, %v241
        %v362 = vsub.f32 0.0, %v242
        %v363 = vsub.f32 0.0, %v243
        %v364 = vsub.f32 0.0, %v244
        %v365 = vmin.f32 %v361, 0.0
        %v366 = vmin.f32 %v362, 0.0
        %v367 = vmin.f32 %v363, 0.0
        %v368 = vmin.f32 %v364, 0.0
        %v369 = vsub.f32 %v365, %v346
        %v370 = vsub.f32 %v366, %v348
        %v371 = vsub.f32 %v367, %v350
        %v372 = vsub.f32 %v368, %v352
        %v373 = vmul.f32 %v245, %v341
        %v374 = vmul.f32 %v246, %v342
        %v375 = vmul.f32 %v247, %v343
        %v376 = vmul.f32 %v248, %v344
        %v377 = vmul.f32 %v373, %v357
        %v378 = vmul.f32 %v374, %v358
        %v379 = vmul.f32 %v375, %v359
        %v380 = vmul.f32 %v376, %v360
        %v381 = vsub.f32 1.0, %v245
        %v382 = vsub.f32 1.0, %v246
        %v383 = vsub.f32 1.0, %v247
        %v384 = vsub.f32 1.0, %v248
        %v385 = vmul.f32 %v381, 2.0
        %v386 = vmul.f32 %v382, 2.0
        %v387 = vmul.f32 %v383, 2.0
        %v388 = vmul.f32 %v384, 2.0
        %v389 = vmul.f32 %v385, %v337
        %v390 = vmul.f32 %v386, %v338
        %v391 = vmul.f32 %v387, %v339
        %v392 = vmul.f32 %v388, %v340
        %v393 = vmul.f32 %v389, %v369
        %v394 = vmul.f32 %v390, %v370
        %v395 = vmul.f32 %v391, %v371
        %v396 = vmul.f32 %v392, %v372
        %v397 = vadd.f32 %v377, %v393
        %v398 = vadd.f32 %v378, %v394
        %v399 = vadd.f32 %v379, %v395
        %v400 = vadd.f32 %v380, %v396
        %v401 = vld [vmem:[%s229] sm:$0xff]
        %v402 = vadd.f32 %v397, %v398
        %v403 = vadd.f32 %v402, %v399
        %v404 = vadd.f32 %v403, %v400
        %v405 = vadd.f32 %v401, %v404
        %406 = vst [vmem:[%s229] sm:$0xff] %v405
        %s407 = sand.u32 %s102, 1
        %s408 = scalar_lea.sflag [#allocation4], %s407
        %s409 = sand.u32 %s102, 1
        %s410 = smul.addr %s409, 8
        %s411 = scalar_lea.vmem [#allocation7], %s410
        // Predicated region
        $region41: #{tpu_custom_call.1} parent=27 // pred_check
          %p412 = pneg %p112
        $region42: #{tpu_custom_call.1} parent=27 // pred_check_branch
          %414 = sbr.rel (%p412) target = $region44
        $region43: #{tpu_custom_call.1} parent=27 // pred_region
          %416 = vsyncadd %s408, 0
          %s417 = smul.addr %s26, 8
          %s418 = scalar_lea.hbm %s2, %s417
          %s420 = sshll.u32 %s411, 4
          %s421 = int_to_ptr.vmem [resolvable:$true] %s420
          %s422 = sshll.u32 %s418, 4
          %s423 = int_to_ptr.hbm [resolvable:$true] %s422
          %425 = dma.vmem_to_hbm [thread:$0]  %s421, 128, %s423, %s408
        $region44: #{tpu_custom_call.1} parent=27 // pred_fallthru
          _
      $region28: #{tpu_custom_call.1} parent=5 // pred_fallthru
        _
      %p426 = scmp.le.s32.totalorder 2, %s17
      // Predicated region
      $region45: #{tpu_custom_call.1} parent=5 // pred_check
        %p427 = pneg %p426
      $region46: #{tpu_custom_call.1} parent=5 // pred_check_branch
        %429 = sbr.rel (%p427) target = $region48
      $region47: #{tpu_custom_call.1} parent=5 // pred_region
        %s430 = ssub.s32 %s17, 2
        // Predicated region
        $region49: #{tpu_custom_call.1} parent=47 // pred_check
          %p431 = pneg %p118
        $region50: #{tpu_custom_call.1} parent=47 // pred_check_branch
          %433 = sbr.rel (%p431) target = $region52
        $region51: #{tpu_custom_call.1} parent=47 // pred_region
          %s434 = sand.u32 %s103, 1
          %s435 = scalar_lea.sflag [#allocation4], %s434
          %s436 = sand.u32 %s103, 1
          %s437 = smul.addr %s436, 8
          %s438 = scalar_lea.vmem [#allocation7], %s437
          %440 = dma.done %s435, 128
        $region52: #{tpu_custom_call.1} parent=47 // pred_fallthru
          _
      $region48: #{tpu_custom_call.1} parent=5 // pred_fallthru
        _
    $region6: #{tpu_custom_call.1} parent=1 // loop_footer
      %s21 = sadd.s32 1, %s17
    $region7: #{tpu_custom_call.1} parent=1 // loop_footer_branch
      %16 = sbr.rel target = $region3
    $region8: #{tpu_custom_call.1} parent=1 // loop_exit
      _
    %441 = vsyncpa [#allocation3], 1
    %s442 = scalar_lea.sflag [#allocation3], 1
    %443 = vsyncpa %s442, 1
    %444 = vsyncpa [#allocation6], 1
    %s445 = scalar_lea.sflag [#allocation6], 1
    %446 = vsyncpa %s445, 1
    %447 = vsyncpa [#allocation4], 1
    %s448 = scalar_lea.sflag [#allocation4], 1
    %449 = vsyncpa %s448, 1

</llo_original>
